<compile_context>
chip_gen: v7x
topology: tpu7x:2x2x1
jax: 0.10.0
libtpu: 0.0.40
codegen_flags: <defaults>
</compile_context>

<pallas_src>
import functools

import jax
import jax.numpy as jnp
from jax.experimental import pallas as pl
from jax.experimental.pallas import tpu as pltpu

F32 = jnp.float32
BF16 = jnp.bfloat16
_VMEM_LIMIT = 48 * 1024 * 1024  # headroom under v7x's 64 MiB physical VMEM


def _cparams(dims):
    return pltpu.CompilerParams(dimension_semantics=dims,
                                vmem_limit_bytes=_VMEM_LIMIT)


def _largest_divisor_leq(n, cap):
    cap = max(1, min(n, cap))
    for d in range(cap, 0, -1):
        if n % d == 0:
            return d
    return 1


# ----------------------- fused 3x3 conv (im2col-free) -----------------------

def _conv3x3_accumulate(xf, w_ref, b_ref, o_ref, acc_ref, *, taps, hw, width,
                        relu):
    """Shared tap-accumulation body.  xf: (tm, tkc) f32, already affine'd."""
    k = pl.program_id(2)

    @pl.when(k == 0)
    def _():
        acc_ref[...] = jnp.zeros_like(acc_ref)

    tm = xf.shape[0]
    height = hw // width
    row = jax.lax.broadcasted_iota(jnp.int32, (tm, 1), 0)
    hw_idx = row % hw
    hh = hw_idx // width
    ww = hw_idx % width

    acc = acc_ref[...]
    for t, dh, dw in taps:                       # statically unrolled (<=9 taps)
        s = dh * width + dw
        amt = (-s) % tm
        xs = pltpu.roll(xf, amt, axis=0) if amt else xf
        if not (dh == 0 and dw == 0):
            valid = ((hh + dh >= 0) & (hh + dh < height) &
                     (ww + dw >= 0) & (ww + dw < width))
            xs = jnp.where(valid, xs, 0.0)       # zero-padding via boundary mask
        acc = acc + jnp.dot(xs.astype(BF16), w_ref[t],
                            preferred_element_type=jnp.float32)
    acc_ref[...] = acc

    @pl.when(k == pl.num_programs(2) - 1)
    def _():
        out = acc_ref[...] + b_ref[...]
        if relu:
            out = jnp.maximum(out, 0.0)
        o_ref[...] = out.astype(o_ref.dtype)


def _conv3x3_kernel_plain(x_ref, w_ref, b_ref, o_ref, acc_ref,
                          *, taps, hw, width, relu):
    _conv3x3_accumulate(x_ref[...].astype(F32), w_ref, b_ref, o_ref, acc_ref,
                        taps=taps, hw=hw, width=width, relu=relu)


def _conv3x3_kernel_affine(x_ref, w_ref, b_ref, sh_ref, si_ref, o_ref, acc_ref,
                           *, taps, hw, width, relu):
    # per-channel affine (LPIPS ScalingLayer) applied BEFORE the boundary mask
    # => identical to scaling then zero-padding.
    xf = (x_ref[...].astype(F32) - sh_ref[...]) * si_ref[...]
    _conv3x3_accumulate(xf, w_ref, b_ref, o_ref, acc_ref,
                        taps=taps, hw=hw, width=width, relu=relu)


def conv3x3(x, w, b, shift=None, inv_scale=None, relu=True):
    """3x3 conv, stride 1, zero-pad 1, NHWC.  x: (B,H,W,Cin), w: (3,3,Cin,Cout).

    If shift/inv_scale are given, (x - shift) * inv_scale is applied in-kernel
    before padding (ScalingLayer fold for conv1_1)."""
    B, H, W, Cin = x.shape
    Cout = w.shape[-1]
    hw = H * W
    M = B * hw

    xf = x.reshape(M, Cin).astype(BF16)
    wf = w.reshape(9, Cin, Cout).astype(BF16)
    bf = b.reshape(1, Cout).astype(F32)

    tkc = Cin if Cin <= 256 else 256
    tnc = Cout if Cout <= 256 else 256
    # TODO(synk): whole images per M-tile; very large spatial dims would need
    # halo tiling inside an image to stay within VMEM.
    bt = _largest_divisor_leq(B, max(1, 4096 // hw))   # whole images per M tile
    tm = bt * hw

    # only taps that can ever be in-bounds (all 9 unless H or W == 1)
    taps = tuple((ki * 3 + kj, ki - 1, kj - 1)
                 for ki in range(3) for kj in range(3)
                 if (H > 1 or ki == 1) and (W > 1 or kj == 1))

    grid = (M // tm, Cout // tnc, Cin // tkc)
    static = dict(taps=taps, hw=hw, width=W, relu=relu)

    in_specs = [
        pl.BlockSpec((tm, tkc), lambda i, j, k: (i, k)),
        pl.BlockSpec((9, tkc, tnc), lambda i, j, k: (0, k, j)),
        pl.BlockSpec((1, tnc), lambda i, j, k: (0, j)),
    ]
    args = [xf, wf, bf]
    if shift is not None:
        kernel = functools.partial(_conv3x3_kernel_affine, **static)
        in_specs += [pl.BlockSpec((1, tkc), lambda i, j, k: (0, k)),
                     pl.BlockSpec((1, tkc), lambda i, j, k: (0, k))]
        args += [shift.reshape(1, Cin).astype(F32),
                 inv_scale.reshape(1, Cin).astype(F32)]
    else:
        kernel = functools.partial(_conv3x3_kernel_plain, **static)

    flops = 2 * M * 9 * Cin * Cout
    bytes_accessed = (M * Cin * 2 + 9 * Cin * Cout * 2 + M * Cout * 2 + Cout * 4)

    out = pl.pallas_call(
        kernel,
        out_shape=jax.ShapeDtypeStruct((M, Cout), BF16),
        grid_spec=pltpu.PrefetchScalarGridSpec(
            num_scalar_prefetch=0,
            grid=grid,
            in_specs=in_specs,
            out_specs=pl.BlockSpec((tm, tnc), lambda i, j, k: (i, j)),
            scratch_shapes=[pltpu.VMEM((tm, tnc), jnp.float32)],
        ),
        compiler_params=_cparams(("parallel", "parallel", "arbitrary")),
        cost_estimate=pl.CostEstimate(flops=flops, transcendentals=0,
                                      bytes_accessed=bytes_accessed),
    )(*args)
    return out.reshape(B, H, W, Cout)


def maxpool2x2(x):
    # TODO(synk): 2x2 max pool kept as plain-JAX glue (negligible vs conv MXU work).
    B, H, W, C = x.shape
    return jnp.max(x.reshape(B, H // 2, 2, W // 2, 2, C), axis=(2, 4))


# ------------------------------- LPIPS head --------------------------------

def _lpips_head_kernel(f_ref, w_ref, o_ref, *, n, inv_hw):
    p = pl.program_id(0)

    @pl.when(p == 0)
    def _():
        o_ref[...] = jnp.zeros_like(o_ref)

    eps = 1e-10
    f = f_ref[...].astype(F32)                  # (2N, thw, C)
    f0, f1 = f[:n], f[n:]
    r0 = pl.reciprocal(jnp.sqrt(jnp.sum(f0 * f0, axis=-1, keepdims=True)) + eps,
                       approx=True)
    r1 = pl.reciprocal(jnp.sqrt(jnp.sum(f1 * f1, axis=-1, keepdims=True)) + eps,
                       approx=True)
    d = (f0 * r0 - f1 * r1) ** 2
    per_pix = jnp.sum(d * w_ref[...], axis=-1)  # 1x1 "lin" conv -> (N, thw)
    o_ref[...] += jnp.sum(per_pix, axis=-1, keepdims=True) * inv_hw


def lpips_head(feats, lin_w, n):
    """channel-normalize -> sq diff -> 1x1 lin conv -> spatial mean. Returns (n,1)."""
    B2, H, W, C = feats.shape
    hw = H * W
    f = feats.reshape(B2, hw, C)
    thw = 1024 if (hw > 1024 and hw % 1024 == 0) else hw
    wv = lin_w.reshape(1, 1, C).astype(F32)
    kernel = functools.partial(_lpips_head_kernel, n=n, inv_hw=1.0 / hw)
    return pl.pallas_call(
        kernel,
        out_shape=jax.ShapeDtypeStruct((n, 1), F32),
        grid_spec=pltpu.PrefetchScalarGridSpec(
            num_scalar_prefetch=0,
            grid=(hw // thw,),
            in_specs=[pl.BlockSpec((B2, thw, C), lambda p: (0, p, 0)),
                      pl.BlockSpec((1, 1, C), lambda p: (0, 0, 0))],
            out_specs=pl.BlockSpec((n, 1), lambda p: (0, 0)),
        ),
        compiler_params=_cparams(("arbitrary",)),
    )(f, wv)


# --------------------------------- L1 loss ----------------------------------

_L1_LANES = 1024


def _l1_kernel(x_ref, y_ref, o_ref, acc_ref, *, inv_count):
    p = pl.program_id(0)

    @pl.when(p == 0)
    def _():
        acc_ref[...] = jnp.zeros_like(acc_ref)

    d = jnp.abs(x_ref[...] - y_ref[...])
    acc_ref[...] += jnp.sum(d, axis=0, keepdims=True)      # (1, lanes)

    @pl.when(p == pl.num_programs(0) - 1)
    def _():
        o_ref[...] = jnp.sum(acc_ref[...], axis=1, keepdims=True) * inv_count


def l1_loss(x, y):
    """torch.abs(x - y).mean() over all elements (lane-dense gridded reduction)."""
    total = x.size
    cols = _L1_LANES
    xf = x.reshape(-1).astype(F32)
    yf = y.reshape(-1).astype(F32)
    rows = pl.cdiv(total, cols)
    tr = rows if rows <= 512 else 512
    rows_p = pl.cdiv(rows, tr) * tr
    pad = rows_p * cols - total
    if pad:
        xf = jnp.pad(xf, (0, pad))      # zero padding adds 0 to the |diff| sum
        yf = jnp.pad(yf, (0, pad))
    xm = xf.reshape(rows_p, cols)
    ym = yf.reshape(rows_p, cols)
    kernel = functools.partial(_l1_kernel, inv_count=1.0 / total)
    out = pl.pallas_call(
        kernel,
        out_shape=jax.ShapeDtypeStruct((1, 1), F32),
        grid_spec=pltpu.PrefetchScalarGridSpec(
            num_scalar_prefetch=0,
            grid=(rows_p // tr,),
            in_specs=[pl.BlockSpec((tr, cols), lambda p: (p, 0)),
                      pl.BlockSpec((tr, cols), lambda p: (p, 0))],
            out_specs=pl.BlockSpec((1, 1), lambda p: (0, 0)),
            scratch_shapes=[pltpu.VMEM((1, cols), jnp.float32)],
        ),
        compiler_params=_cparams(("arbitrary",)),
    )(xm, ym)
    return out[0, 0]


# ------------------------------ LPIPS network ------------------------------

_VGG_CFG = [
    ("conv1_1", 3, 64), ("conv1_2", 64, 64),
    ("conv2_1", 64, 128), ("conv2_2", 128, 128),
    ("conv3_1", 128, 256), ("conv3_2", 256, 256), ("conv3_3", 256, 256),
    ("conv4_1", 256, 512), ("conv4_2", 512, 512), ("conv4_3", 512, 512),
    ("conv5_1", 512, 512), ("conv5_2", 512, 512), ("conv5_3", 512, 512),
]
_TAPS = {"conv1_2", "conv2_2", "conv3_3", "conv4_3", "conv5_3"}  # relu1_2..relu5_3
_POOL_BEFORE = {"conv2_1", "conv3_1", "conv4_1", "conv5_1"}
_LPIPS_CHNS = [64, 128, 256, 512, 512]


def init_lpips_params(key):
    # TODO(synk): pretrained VGG16 / LPIPS "lin" weights cannot be loaded
    # in-script (no files / network); deterministic random init stands in.
    params = {"convs": [], "lins": []}
    for _, cin, cout in _VGG_CFG:
        key, kw, kb = jax.random.split(key, 3)
        w = jax.random.normal(kw, (3, 3, cin, cout), F32) * (2.0 / (9.0 * cin)) ** 0.5
        b = jax.random.normal(kb, (cout,), F32) * 0.01
        params["convs"].append((w, b))
    for c in _LPIPS_CHNS:
        key, kw = jax.random.split(key)
        params["lins"].append(jnp.abs(jax.random.normal(kw, (c,), F32)) / c)
    # ScalingLayer constants from LPIPS (inputs expected in [-1, 1]),
    # folded into conv1_1's kernel as an in-kernel per-channel affine.
    params["shift"] = jnp.array([-0.030, -0.088, -0.188], F32).reshape(1, 3)
    params["inv_scale"] = 1.0 / jnp.array([0.458, 0.448, 0.450], F32).reshape(1, 3)
    return params


def vgg16_features(x_nhwc, params):
    feats = []
    h = x_nhwc
    first = True
    for (name, _, _), (w, b) in zip(_VGG_CFG, params["convs"]):
        if name in _POOL_BEFORE:
            h = maxpool2x2(h)
        if first:
            h = conv3x3(h, w, b, params["shift"], params["inv_scale"], relu=True)
            first = False
        else:
            h = conv3x3(h, w, b, relu=True)
        if name in _TAPS:
            feats.append(h)
    return feats


def lpips(params, in0_nchw, in1_nchw):
    # layout: NCHW (PyTorch) -> NHWC for TPU kernels; run both images through
    # the VGG trunk as ONE batched pass (shared weights, 2x M per matmul).
    n = in0_nchw.shape[0]
    x0 = jnp.transpose(in0_nchw, (0, 2, 3, 1)).astype(F32)
    x1 = jnp.transpose(in1_nchw, (0, 2, 3, 1)).astype(F32)
    x = jnp.concatenate([x0, x1], axis=0).astype(BF16)
    feats = vgg16_features(x, params)
    val = jnp.zeros((n, 1), F32)
    for f, lw in zip(feats, params["lins"]):
        val = val + lpips_head(f, lw, n)
    return val  # (N, 1)  ==  PyTorch LPIPS output (N,1,1,1) squeezed


# ------------------------------ Vanila forward ------------------------------

def vanila_forward(params, inputs, reconstructions,
                   pixelloss_weight=1.0, perceptual_weight=1.0, split="train"):
    # (pixelloss_weight is stored but unused in the original forward; kept for parity)
    rec_loss = l1_loss(inputs, reconstructions)
    if perceptual_weight > 0:
        p_loss = jnp.mean(lpips(params, inputs, reconstructions))
    else:
        p_loss = jnp.zeros((), F32)
    loss = rec_loss + perceptual_weight * p_loss
    log = {
        f"{split}/total_loss": loss,
        f"{split}/rec_loss": rec_loss,
        f"{split}/p_loss": p_loss,
    }
    return loss, log


if __name__ == "__main__":
    key = jax.random.PRNGKey(0)
    kp, ka, kb = jax.random.split(key, 3)
    params = init_lpips_params(kp)

    # NCHW inputs like the PyTorch module, values roughly in [-1, 1]
    inputs = jnp.tanh(jax.random.normal(ka, (2, 3, 16, 16), F32))
    reconstructions = jnp.tanh(jax.random.normal(kb, (2, 3, 16, 16), F32))

    loss, log = vanila_forward(params, inputs, reconstructions)
    loss = jax.block_until_ready(loss)
    for v in log.values():
        jax.block_until_ready(v)
    assert bool(jnp.isfinite(loss))
    print("KERNEL_OK")
</pallas_src>

<mosaic_0001>
module attributes {stable_mosaic.version = 11 : i64} {
  func.func @_l1_kernel(%arg0: i32, %arg1: memref<2x1024xf32, #tpu.memory_space<vmem>>, %arg2: memref<2x1024xf32, #tpu.memory_space<vmem>>, %arg3: memref<1x1xf32, #tpu.memory_space<vmem>>, %arg4: memref<1x1024xf32, #tpu.memory_space<vmem>>) attributes {dimension_semantics = [#tpu.dimension_semantics<arbitrary>], iteration_bounds = array<i64: 1>, scalar_prefetch = 0 : i64, scratch_operands = 1 : i64, tpu.core_type = #tpu.core_type<tc>, window_params = [{transform_indices = @transform_0, window_bounds = array<i64: 2, 1024>}, {transform_indices = @transform_1, window_bounds = array<i64: 2, 1024>}, {pipeline_mode = #tpu.pipeline_mode<synchronous>, transform_indices = @transform_2, window_bounds = array<i64: 1, 1>}]} {
    %c0_i32 = arith.constant 0 : i32
    %0 = arith.cmpi eq, %arg0, %c0_i32 : i32
    %1 = arith.extui %0 : i1 to i32
    %c0_i32_0 = arith.constant 0 : i32
    %2 = arith.cmpi ne, %1, %c0_i32_0 : i32
    scf.if %2 {
      %cst_10 = arith.constant 0.000000e+00 : f32
      %15 = vector.broadcast %cst_10 : f32 to vector<1x1024xf32>
      %c0_11 = arith.constant 0 : index
      %c0_12 = arith.constant 0 : index
      %16 = vector.load %arg4[%c0_11, %c0_12] : memref<1x1024xf32, #tpu.memory_space<vmem>>, vector<1x1024xf32>
      tpu.vector_store %arg4[%c0_11, %c0_12], %15 {strides = array<i32>} : memref<1x1024xf32, #tpu.memory_space<vmem>>, vector<1x1024xf32>,
    } else {
    }
    %c0 = arith.constant 0 : index
    %c0_1 = arith.constant 0 : index
    %3 = vector.load %arg1[%c0, %c0_1] : memref<2x1024xf32, #tpu.memory_space<vmem>>, vector<2x1024xf32>
    %c0_2 = arith.constant 0 : index
    %c0_3 = arith.constant 0 : index
    %4 = vector.load %arg2[%c0_2, %c0_3] : memref<2x1024xf32, #tpu.memory_space<vmem>>, vector<2x1024xf32>
    %5 = arith.subf %3, %4 : vector<2x1024xf32>
    %6 = math.absf %5 : vector<2x1024xf32>
    %c0_4 = arith.constant 0 : index
    %c0_5 = arith.constant 0 : index
    %7 = vector.load %arg4[%c0_4, %c0_5] : memref<1x1024xf32, #tpu.memory_space<vmem>>, vector<1x1024xf32>
    %cst = arith.constant dense<0.000000e+00> : vector<1024xf32>
    %8 = vector.multi_reduction <add>, %6, %cst [0] : vector<2x1024xf32> to vector<1024xf32>
    %9 = vector.shape_cast %8 : vector<1024xf32> to vector<1x1024xf32>
    %10 = arith.addf %7, %9 : vector<1x1024xf32>
    %c0_6 = arith.constant 0 : index
    %c0_7 = arith.constant 0 : index
    %11 = vector.load %arg4[%c0_6, %c0_7] : memref<1x1024xf32, #tpu.memory_space<vmem>>, vector<1x1024xf32>
    tpu.vector_store %arg4[%c0_6, %c0_7], %10 {strides = array<i32>} : memref<1x1024xf32, #tpu.memory_space<vmem>>, vector<1x1024xf32>,
    %c0_i32_8 = arith.constant 0 : i32
    %12 = arith.cmpi eq, %arg0, %c0_i32_8 : i32
    %13 = arith.extui %12 : i1 to i32
    %c0_i32_9 = arith.constant 0 : i32
    %14 = arith.cmpi ne, %13, %c0_i32_9 : i32
    scf.if %14 {
      %c0_10 = arith.constant 0 : index
      %c0_11 = arith.constant 0 : index
      %15 = vector.load %arg4[%c0_10, %c0_11] : memref<1x1024xf32, #tpu.memory_space<vmem>>, vector<1x1024xf32>
      %cst_12 = arith.constant dense<0.000000e+00> : vector<1xf32>
      %16 = vector.multi_reduction <add>, %15, %cst_12 [1] : vector<1x1024xf32> to vector<1xf32>
      %17 = vector.shape_cast %16 : vector<1xf32> to vector<1x1xf32>
      %cst_13 = arith.constant 6.51041686E-4 : f32
      %18 = vector.broadcast %cst_13 : f32 to vector<1x1xf32>
      %19 = arith.mulf %17, %18 : vector<1x1xf32>
      %c0_14 = arith.constant 0 : index
      %c0_15 = arith.constant 0 : index
      %20 = vector.load %arg3[%c0_14, %c0_15] : memref<1x1xf32, #tpu.memory_space<vmem>>, vector<1x1xf32>
      tpu.vector_store %arg3[%c0_14, %c0_15], %19 {strides = array<i32>} : memref<1x1xf32, #tpu.memory_space<vmem>>, vector<1x1xf32>,
    } else {
    }
    return
  }
  func.func @transform_0(%arg0: i32) -> (i32, i32) {
    %c0_i32 = arith.constant 0 : i32
    %c0_i32_0 = arith.constant 0 : i32
    return %arg0, %c0_i32 : i32, i32
  }
  func.func @transform_1(%arg0: i32) -> (i32, i32) {
    %c0_i32 = arith.constant 0 : i32
    %c0_i32_0 = arith.constant 0 : i32
    return %arg0, %c0_i32 : i32, i32
  }
  func.func @transform_2(%arg0: i32) -> (i32, i32) {
    %c0_i32 = arith.constant 0 : i32
    %c0_i32_0 = arith.constant 0 : i32
    %c0_i32_1 = arith.constant 0 : i32
    return %c0_i32, %c0_i32_0 : i32, i32
  }
}

</mosaic_0001>

<llo_original>
// kernel: tpu_custom_call.1
$region0: #{tpu_custom_call.1}
  #allocation0 [shape = 'u32[]', space=smem, size = 0x4, offset = 0x4, fixed_abs, tag = 'smem constant byte address 0x4 - core index']
  #allocation1 [shape = 'u32[144,128]{1,0:T(1,128)}', space=vmem, size = 0x12000, scoped, tag = 'internal scratch']
  #allocation2 [shape = 'f32[1,1024]{1,0:T(1,128)}', space=vmem, size = 0x1000, scoped, tag = 'scratch operand']
  %s0 = inlined_call_operand.hbm [shape: f32[2,1024], index: 0, kind: input, shape index: {}]
  %s1 = inlined_call_operand.hbm [shape: f32[2,1024], index: 1, kind: input, shape index: {}]
  %s2 = inlined_call_operand.hbm [shape: f32[1,1], index: 2, kind: output, shape index: {}]
  %s3 = sld [smem:[#allocation0]]
  $region34: #{tpu_custom_call.1} parent=0
    _
  %s5 = ssub.s32 1, %s3
  %s6 = scalar_select 0, %s5, %s3
  $region1: #{tpu_custom_call.1} parent=0
    #allocation3 [shape = 'u8[8192]{0}', space=vmem, size = 0x2000, scoped, tag = 'input window, operand 0, single buffered']
    #allocation4 [shape = 's32[1]{0}', space=sflag, size = 0x4, scoped, tag = 'scoped memory for tpu_custom_call.1']
    #allocation5 [shape = 's32[1]{0}', space=sflag, size = 0x4, scoped, tag = 'scoped memory for tpu_custom_call.1']
    #allocation6 [shape = 'u8[8192]{0}', space=vmem, size = 0x2000, scoped, tag = 'input window, operand 1, single buffered']
    #allocation7 [shape = 's32[1]{0}', space=sflag, size = 0x4, scoped, tag = 'scoped memory for tpu_custom_call.1']
    #allocation8 [shape = 'u8[512]{0}', space=vmem, size = 0x400, scoped, tag = 'output window, operand 0, single buffered']
    %7 = vsyncpa [#allocation4], 0
    %8 = vsyncpa [#allocation7], 0
    %9 = vsyncpa [#allocation5], 0
    // Predicated region
    $region2: #{tpu_custom_call.1} parent=1 // pred_check
      _
    $region3: #{tpu_custom_call.1} parent=1 // pred_check_branch
      %11 = sbr.rel (0) target = $region5
    $region4: #{tpu_custom_call.1} parent=1 // pred_region
      %s13 = ssub.s32 256, 256
      %14 = vsyncadd [#allocation4], %s13
      %s16 = sshll.u32 [#allocation3], 4
      %s17 = int_to_ptr.vmem [resolvable:$true] %s16
      %19 = dma.hbm_to_vmem [thread:$0]  %s0, 256, %s17, [#allocation4]
    $region5: #{tpu_custom_call.1} parent=1 // pred_fallthru
      _
    // Predicated region
    $region6: #{tpu_custom_call.1} parent=1 // pred_check
      _
    $region7: #{tpu_custom_call.1} parent=1 // pred_check_branch
      %21 = sbr.rel (0) target = $region9
    $region8: #{tpu_custom_call.1} parent=1 // pred_region
      %s23 = ssub.s32 256, 256
      %24 = vsyncadd [#allocation7], %s23
      %s26 = sshll.u32 [#allocation6], 4
      %s27 = int_to_ptr.vmem [resolvable:$true] %s26
      %29 = dma.hbm_to_vmem [thread:$0]  %s1, 256, %s27, [#allocation7]
    $region9: #{tpu_custom_call.1} parent=1 // pred_fallthru
      _
    // Predicated region
    $region10: #{tpu_custom_call.1} parent=1 // pred_check
      _
    $region11: #{tpu_custom_call.1} parent=1 // pred_check_branch
      %31 = sbr.rel (0) target = $region13
    $region12: #{tpu_custom_call.1} parent=1 // pred_region
      %32 = dma.done [#allocation4], 256
    $region13: #{tpu_custom_call.1} parent=1 // pred_fallthru
      _
    // Predicated region
    $region14: #{tpu_custom_call.1} parent=1 // pred_check
      _
    $region15: #{tpu_custom_call.1} parent=1 // pred_check_branch
      %34 = sbr.rel (0) target = $region17
    $region16: #{tpu_custom_call.1} parent=1 // pred_region
      %35 = dma.done [#allocation7], 256
    $region17: #{tpu_custom_call.1} parent=1 // pred_fallthru
      _
    %p36 = scmp.eq.s32.totalorder 0, 0
    // Predicated region
    $region18: #{tpu_custom_call.1} parent=1 // pred_check
      %p37 = pneg %p36
    $region19: #{tpu_custom_call.1} parent=1 // pred_check_branch
      %39 = sbr.rel (%p37) target = $region21
    $region20: #{tpu_custom_call.1} parent=1 // pred_region
      %40 = vst [vmem:[#allocation2] sm:$0xff] 0.0
    $region21: #{tpu_custom_call.1} parent=1 // pred_fallthru
      _
    %v41 = vld [vmem:[#allocation3] sm:$0xff]
    %v42 = vld [vmem:[#allocation3 + $0x8] sm:$0xff]
    %v43 = vld [vmem:[#allocation6] sm:$0xff]
    %v44 = vld [vmem:[#allocation6 + $0x8] sm:$0xff]
    %v45 = vsub.f32 %v41, %v43
    %v46 = vsub.f32 %v42, %v44
    %v47 = vand.u32 2147483647, %v45
    %v48 = vand.u32 2147483647, %v46
    %v49 = vld [vmem:[#allocation2] sm:$0xff]
    %v52 = vcombine.high %v47, %v47
    %v54 = vunpack.c.l.s4 1983009808
    %v55 = vunpack.c.0.s8 %v54
    %v56 = vlaneseq
    %v57 = vshrl.u32 %v56, 7
    %v58 = vsub.s32 %v55, %v57
    %v59 = vrot.slane %v47, %v58
    %v61 = vunpack.c.l.s4 1983009808
    %v62 = vunpack.c.0.s8 %v61
    %v63 = vlaneseq
    %v64 = vshrl.u32 %v63, 7
    %v65 = vsub.s32 %v62, %v64
    %v66 = vrot.slane %v52, %v65
    %v67 = vcombine.high %v59, %v59
    %v68 = vcombine.high %v66, %v66
    %v69 = vcombine.high %v48, %v48
    %v71 = vunpack.c.l.s4 1983009808
    %v72 = vunpack.c.0.s8 %v71
    %v73 = vlaneseq
    %v74 = vshrl.u32 %v73, 7
    %v75 = vsub.s32 %v72, %v74
    %v76 = vrot.slane %v48, %v75
    %v78 = vunpack.c.l.s4 1983009808
    %v79 = vunpack.c.0.s8 %v78
    %v80 = vlaneseq
    %v81 = vshrl.u32 %v80, 7
    %v82 = vsub.s32 %v79, %v81
    %v83 = vrot.slane %v69, %v82
    %v84 = vcombine.high %v76, %v76
    %v85 = vcombine.high %v83, %v83
    %vm94 = vcmask 1041408
    %v95 = vsel %vm94, %v59, 0.0
    %v96 = vrot.slane %v95, 4
    %v97 = vadd.f32 %v95, %v96
    %v98 = vrot.slane %v97, 2
    %v99 = vadd.f32 %v97, %v98
    %v100 = vrot.slane %v99, 1
    %v101 = vadd.f32 %v99, %v100
    %v102 = vsel %vm94, %v67, 0.0
    %v103 = vrot.slane %v102, 4
    %v104 = vadd.f32 %v102, %v103
    %v105 = vrot.slane %v104, 2
    %v106 = vadd.f32 %v104, %v105
    %v107 = vrot.slane %v106, 1
    %v108 = vadd.f32 %v106, %v107
    %v109 = vsel %vm94, %v66, 0.0
    %v110 = vrot.slane %v109, 4
    %v111 = vadd.f32 %v109, %v110
    %v112 = vrot.slane %v111, 2
    %v113 = vadd.f32 %v111, %v112
    %v114 = vrot.slane %v113, 1
    %v115 = vadd.f32 %v113, %v114
    %v116 = vsel %vm94, %v68, 0.0
    %v117 = vrot.slane %v116, 4
    %v118 = vadd.f32 %v116, %v117
    %v119 = vrot.slane %v118, 2
    %v120 = vadd.f32 %v118, %v119
    %v121 = vrot.slane %v120, 1
    %v122 = vadd.f32 %v120, %v121
    %v123 = vsel %vm94, %v76, 0.0
    %v124 = vrot.slane %v123, 4
    %v125 = vadd.f32 %v123, %v124
    %v126 = vrot.slane %v125, 2
    %v127 = vadd.f32 %v125, %v126
    %v128 = vrot.slane %v127, 1
    %v129 = vadd.f32 %v127, %v128
    %v130 = vsel %vm94, %v84, 0.0
    %v131 = vrot.slane %v130, 4
    %v132 = vadd.f32 %v130, %v131
    %v133 = vrot.slane %v132, 2
    %v134 = vadd.f32 %v132, %v133
    %v135 = vrot.slane %v134, 1
    %v136 = vadd.f32 %v134, %v135
    %v137 = vsel %vm94, %v83, 0.0
    %v138 = vrot.slane %v137, 4
    %v139 = vadd.f32 %v137, %v138
    %v140 = vrot.slane %v139, 2
    %v141 = vadd.f32 %v139, %v140
    %v142 = vrot.slane %v141, 1
    %v143 = vadd.f32 %v141, %v142
    %v144 = vsel %vm94, %v85, 0.0
    %v145 = vrot.slane %v144, 4
    %v146 = vadd.f32 %v144, %v145
    %v147 = vrot.slane %v146, 2
    %v148 = vadd.f32 %v146, %v147
    %v149 = vrot.slane %v148, 1
    %v150 = vadd.f32 %v148, %v149
    %v159 = vcombine.low %v101, %v108
    %v160 = vcombine.low %v115, %v122
    %v161 = vcombine.low %v129, %v136
    %v162 = vcombine.low %v143, %v150
    %v164 = vunpack.c.l.s4 1966171168
    %v165 = vunpack.c.0.s8 %v164
    %v166 = vlaneseq
    %v167 = vshrl.u32 %v166, 7
    %v168 = vsub.s32 %v165, %v167
    %v169 = vrot.slane %v159, %v168
    %v171 = vunpack.c.l.s4 1966171168
    %v172 = vunpack.c.0.s8 %v171
    %v173 = vlaneseq
    %v174 = vshrl.u32 %v173, 7
    %v175 = vsub.s32 %v172, %v174
    %v176 = vrot.slane %v160, %v175
    %v178 = vunpack.c.l.s4 1966171168
    %v179 = vunpack.c.0.s8 %v178
    %v180 = vlaneseq
    %v181 = vshrl.u32 %v180, 7
    %v182 = vsub.s32 %v179, %v181
    %v183 = vrot.slane %v161, %v182
    %v185 = vunpack.c.l.s4 1966171168
    %v186 = vunpack.c.0.s8 %v185
    %v187 = vlaneseq
    %v188 = vshrl.u32 %v187, 7
    %v189 = vsub.s32 %v186, %v188
    %v190 = vrot.slane %v162, %v189
    %v191 = vcombine.low %v169, %v176
    %v192 = vcombine.low %v183, %v190
    %v194 = vunpack.c.l.s4 1966171168
    %v195 = vunpack.c.0.s8 %v194
    %v196 = vlaneseq
    %v197 = vshrl.u32 %v196, 7
    %v198 = vsub.s32 %v195, %v197
    %v199 = vrot.slane %v191, %v198
    %v201 = vunpack.c.l.s4 1966171168
    %v202 = vunpack.c.0.s8 %v201
    %v203 = vlaneseq
    %v204 = vshrl.u32 %v203, 7
    %v205 = vsub.s32 %v202, %v204
    %v206 = vrot.slane %v192, %v205
    %v207 = vcombine.low %v199, %v206
    %v209 = vadd.f32 %v49, %v207
    %210 = vst [vmem:[#allocation2] sm:$0xff] %v209
    // Predicated region
    $region22: #{tpu_custom_call.1} parent=1 // pred_check
      %p211 = pneg %p36
    $region23: #{tpu_custom_call.1} parent=1 // pred_check_branch
      %213 = sbr.rel (%p211) target = $region25
    $region24: #{tpu_custom_call.1} parent=1 // pred_region
      %v214 = vld [vmem:[#allocation2] sm:$0xff]
      %v216 = vlaneseq
      %v217 = vshrl.u32 %v216, 7
      %v218 = vsub.s32 0, %v217
      %v219 = vrot.slane %v214, %v218
      %v220 = vlaneseq
      %v221 = vshrl.u32 %v220, 7
      %v222 = vsub.s32 1, %v221
      %v223 = vrot.slane %v214, %v222
      %v224 = vlaneseq
      %v225 = vshrl.u32 %v224, 7
      %v226 = vsub.s32 2, %v225
      %v227 = vrot.slane %v214, %v226
      %v228 = vlaneseq
      %v229 = vshrl.u32 %v228, 7
      %v230 = vsub.s32 3, %v229
      %v231 = vrot.slane %v214, %v230
      %v232 = vlaneseq
      %v233 = vshrl.u32 %v232, 7
      %v234 = vsub.s32 4, %v233
      %v235 = vrot.slane %v214, %v234
      %v236 = vlaneseq
      %v237 = vshrl.u32 %v236, 7
      %v238 = vsub.s32 5, %v237
      %v239 = vrot.slane %v214, %v238
      %v240 = vlaneseq
      %v241 = vshrl.u32 %v240, 7
      %v242 = vsub.s32 6, %v241
      %v243 = vrot.slane %v214, %v242
      %v244 = vlaneseq
      %v245 = vshrl.u32 %v244, 7
      %v246 = vsub.s32 7, %v245
      %v247 = vrot.slane %v214, %v246
      %vm256 = vcmask 1040384
      %v257 = vsel %vm256, %v219, 0.0
      %v258 = vsel %vm256, %v223, 0.0
      %v259 = vadd.f32 %v257, %v258
      %v260 = vsel %vm256, %v227, 0.0
      %v261 = vadd.f32 %v259, %v260
      %v262 = vsel %vm256, %v231, 0.0
      %v263 = vadd.f32 %v261, %v262
      %v264 = vsel %vm256, %v235, 0.0
      %v265 = vadd.f32 %v263, %v264
      %v266 = vsel %vm256, %v239, 0.0
      %v267 = vadd.f32 %v265, %v266
      %v268 = vsel %vm256, %v243, 0.0
      %v269 = vadd.f32 %v267, %v268
      %v270 = vsel %vm256, %v247, 0.0
      %v271 = vadd.f32 %v269, %v270
      %272 = vadd.xlane.f32.xlu0 %v271
      %v273 = vpop.xlane.xlu0 %272
      %v274 = vmul.f32 %v273, 0.0006510417
      %vm275 = vcmask 0
      %276 = vst.msk [vmem:[#allocation8] sm:$0x1] %vm275, %v274
    $region25: #{tpu_custom_call.1} parent=1 // pred_fallthru
      _
    // Predicated region
    $region26: #{tpu_custom_call.1} parent=1 // pred_check
      _
    $region27: #{tpu_custom_call.1} parent=1 // pred_check_branch
      %278 = sbr.rel (0) target = $region29
    $region28: #{tpu_custom_call.1} parent=1 // pred_region
      %s280 = ssub.s32 16, 16
      %281 = vsyncadd [#allocation5], %s280
      %s283 = sshll.u32 [#allocation8], 4
      %s284 = int_to_ptr.vmem [resolvable:$true] %s283
      %286 = dma.vmem_to_hbm [thread:$0]  %s284, 16, %s2, [#allocation5]
    $region29: #{tpu_custom_call.1} parent=1 // pred_fallthru
      _
    // Predicated region
    $region30: #{tpu_custom_call.1} parent=1 // pred_check
      _
    $region31: #{tpu_custom_call.1} parent=1 // pred_check_branch
      %288 = sbr.rel (0) target = $region33
    $region32: #{tpu_custom_call.1} parent=1 // pred_region
      %289 = dma.done [#allocation5], 16
    $region33: #{tpu_custom_call.1} parent=1 // pred_fallthru
      _
    %290 = vsyncpa [#allocation4], 1
    %291 = vsyncpa [#allocation7], 1
    %292 = vsyncpa [#allocation5], 1

</llo_original>
